<compile_context>
chip_gen: v5e
topology: v5e:2x2
jax: 0.10.0
libtpu: 0.0.40
codegen_flags: <defaults>
</compile_context>

<pallas_src>
import math

import jax
import jax.numpy as jnp
from jax import lax
from jax.experimental import pallas as pl
from jax.experimental.pallas import tpu as pltpu


def _make_kernel(KH, KW, Wh, TM, C):
    M = TM * Wh

    def kernel(x_ref, w_ref, p_ref, o_ref):
        # x_ref: (1, 1, 2, C, L) bf16  phase-split (stride 2), channel-major, rows flattened
        # w_ref: (KH*KW, C, C)   bf16  w_ref[t] = W[:, :, i, j]   (out-ch, in-ch)
        # p_ref: (3, C, 1)       f32   rows: BN scale, shift (bias + BN), PReLU alpha
        # o_ref: (1, 1, C, M)          M = TM*Wh output pixels on the lane axis
        acc = None
        for i in range(KH):                      # static unroll over kernel taps
            for j in range(KW):
                # input column 2*w + j  ==  (phase j % 2, half-column w + j // 2)
                start = i * Wh + (j // 2)        # static lane offset
                xs = x_ref[0, 0, j % 2, :, pl.ds(start, M)]            # (C, M) bf16
                d = jnp.dot(w_ref[i * KW + j], xs,
                            preferred_element_type=jnp.float32)        # (C, M) f32 acc
                acc = d if acc is None else acc + d
        scale, shift, alpha = p_ref[0], p_ref[1], p_ref[2]             # (C, 1) each
        y = acc * scale + shift                  # conv bias + eval-mode BatchNorm
        y = jnp.where(y > 0, y, alpha * y)       # per-channel PReLU
        o_ref[0, 0] = y.astype(o_ref.dtype)

    return kernel


def conv2d_unit_forward(x_nchw, w_oihw, conv_b, bn_gamma, bn_beta, bn_mean, bn_var,
                        prelu_alpha, *, eps=1e-5, out_dtype=jnp.float32,
                        vmem_block_budget=16 * 1024 * 1024):
    """Forward of Conv2dUnit. x_nchw: (N, C, H, W) -> (N, C, H_out, W_out)."""
    N, C, H, W = x_nchw.shape
    Cout, Cin, KH, KW = w_oihw.shape
    assert Cin == C and Cout == C
    HO = H - KH + 1
    WO = (W - KW) // 2 + 1
    Wh = (W + 1) // 2
    # Right-edge taps of garbage columns (w >= WO) deliberately wrap into the next flattened
    # row; valid columns never wrap as long as this holds (guards future k/stride changes):
    assert WO + (KW - 1) // 2 <= Wh

    # --- tile-size derivation from a VMEM budget (double-buffered x and out + f32 acc) ---
    x_bytes = 2                                   # bf16 input
    o_bytes = jnp.dtype(out_dtype).itemsize
    row_bytes = C * Wh * (2 * 2 * x_bytes + 2 * o_bytes + 4)
    TM = int(min(HO, max(1, vmem_block_budget // row_bytes)))
    if N == 1 and HO > 1:
        TM = min(TM, pl.cdiv(HO, 2))              # NB >= 2 so both v7x TensorCores get work
    NB = pl.cdiv(HO, TM)
    Hpad = NB * TM + KH - 1                       # input rows covering all (padded) blocks
    R = TM + KH - 1                               # input rows per block (with halo)
    pad_extra = (KW - 1) // 2                     # guard tail over-read of the last tap
    L = R * Wh + pad_extra
    M = TM * Wh

    # --- layout plumbing (plain JAX, fuses into ~one relayout pass):
    #     NCHW f32 -> phase-split, channel-major, H-blocked with (KH-1)-row halo, bf16 ---
    # TODO(synk): the halo duplication is still a host-side HBM pass; removing it needs
    # element-indexed (overlapping) BlockSpecs or manual DMA double-buffering.
    x = x_nchw.astype(jnp.bfloat16)
    if W % 2:
        x = jnp.pad(x, ((0, 0), (0, 0), (0, 0), (0, 1)))
    x = x.reshape(N, C, H, Wh, 2).transpose(0, 4, 1, 2, 3)              # (N, 2, C, H, Wh)
    x = jnp.pad(x, ((0, 0), (0, 0), (0, 0), (0, Hpad - H), (0, 0)))
    ridx = jnp.arange(NB)[:, None] * TM + jnp.arange(R)[None, :]        # (NB, R) overlap rows
    x = x[:, :, :, ridx]                                                # (N, 2, C, NB, R, Wh)
    x = x.transpose(0, 3, 1, 2, 4, 5).reshape(N, NB, 2, C, R * Wh)      # rows flattened (lane)
    if pad_extra:
        x = jnp.pad(x, ((0, 0), (0, 0), (0, 0), (0, 0), (0, pad_extra)))

    # Per-tap (out-ch, in-ch) weight tiles, bf16, UNSCALED (BN scale goes in the f32 epilogue).
    w2 = jnp.transpose(w_oihw, (2, 3, 0, 1)).reshape(KH * KW, C, C).astype(jnp.bfloat16)

    # TODO(synk): training-mode BatchNorm (batch statistics over N,H,W) is not implemented;
    # inference (running-stats) semantics are used.
    inv_std = 1.0 / jnp.sqrt(bn_var.astype(jnp.float32) + eps)
    scale = bn_gamma.astype(jnp.float32) * inv_std
    shift = bn_beta.astype(jnp.float32) + (conv_b.astype(jnp.float32)
                                           - bn_mean.astype(jnp.float32)) * scale
    params = jnp.stack([scale, shift, prelu_alpha.astype(jnp.float32)])[:, :, None]  # (3, C, 1)

    kernel = _make_kernel(KH, KW, Wh, TM, C)
    flops = 2 * N * NB * (KH * KW) * C * C * M
    bytes_accessed = (N * NB * 2 * C * L * x_bytes      # bf16 input windows
                      + KH * KW * C * C * 2             # bf16 weights
                      + 3 * C * 4                       # f32 params
                      + N * NB * C * M * o_bytes)       # output

    out = pl.pallas_call(
        kernel,
        out_shape=jax.ShapeDtypeStruct((N, NB, C, M), out_dtype),
        grid_spec=pltpu.PrefetchScalarGridSpec(
            num_scalar_prefetch=0,
            grid=(N, NB),
            in_specs=[
                pl.BlockSpec((1, 1, 2, C, L), lambda n, hb: (n, hb, 0, 0, 0)),
                pl.BlockSpec((KH * KW, C, C), lambda n, hb: (0, 0, 0)),
                pl.BlockSpec((3, C, 1), lambda n, hb: (0, 0, 0)),
            ],
            out_specs=pl.BlockSpec((1, 1, C, M), lambda n, hb: (n, hb, 0, 0)),
        ),
        compiler_params=pltpu.CompilerParams(
            dimension_semantics=("parallel", "parallel"),
            vmem_limit_bytes=32 * 1024 * 1024),
        cost_estimate=pl.CostEstimate(flops=flops, transcendentals=0,
                                      bytes_accessed=bytes_accessed),
    )(x, w2, params)

    # (N, NB, C, M) is already channel-major: view-reshape + slice; transpose only if NB > 1.
    if NB == 1:
        out = out.reshape(N, C, TM, Wh)
    else:
        out = out.reshape(N, NB, C, TM, Wh).transpose(0, 2, 1, 3, 4).reshape(N, C, NB * TM, Wh)
    return out[:, :, :HO, :WO]


if __name__ == "__main__":
    key = jax.random.PRNGKey(0)
    N, C, H, W = 2, 8, 16, 16
    KH, KW = 3, 3
    k_x, k_w, k_b = jax.random.split(key, 3)

    # deterministic synthetic parameters (mimic PyTorch default inits)
    x = jax.random.normal(k_x, (N, C, H, W), jnp.float32)
    fan_in = C * KH * KW
    bound = 1.0 / math.sqrt(fan_in)
    w = jax.random.uniform(k_w, (C, C, KH, KW), jnp.float32, -bound, bound)  # (O, I, KH, KW)
    b = jax.random.uniform(k_b, (C,), jnp.float32, -bound, bound)
    bn_gamma = jnp.ones((C,), jnp.float32)
    bn_beta = jnp.zeros((C,), jnp.float32)
    bn_mean = jnp.zeros((C,), jnp.float32)
    bn_var = jnp.ones((C,), jnp.float32)
    prelu_alpha = jnp.full((C,), 0.25, jnp.float32)

    out = conv2d_unit_forward(x, w, b, bn_gamma, bn_beta, bn_mean, bn_var, prelu_alpha)
    out = jax.block_until_ready(out)

    # plain-JAX reference (same bf16 rounding of x / w as the kernel path; scale/shift in f32)
    eps = 1e-5
    inv_std = 1.0 / jnp.sqrt(bn_var + eps)
    scale = bn_gamma * inv_std
    shift = bn_beta + (b - bn_mean) * scale
    xq = x.astype(jnp.bfloat16).astype(jnp.float32)
    wq = w.astype(jnp.bfloat16).astype(jnp.float32)
    y = lax.conv_general_dilated(
        xq, wq, window_strides=(1, 2), padding="VALID",
        dimension_numbers=("NCHW", "OIHW", "NCHW"),
        precision=lax.Precision.HIGHEST)
    y = y * scale[None, :, None, None] + shift[None, :, None, None]
    y = jnp.where(y > 0, y, prelu_alpha[None, :, None, None] * y)

    assert out.shape == (N, C, H - KH + 1, (W - KW) // 2 + 1), out.shape
    err = float(jnp.max(jnp.abs(out - y)))
    assert jnp.allclose(out, y, rtol=2e-3, atol=2e-3), err

    # bf16-output path (halves kernel HBM writes) — smoke-check with a bf16-level tolerance
    out_bf = conv2d_unit_forward(x, w, b, bn_gamma, bn_beta, bn_mean, bn_var, prelu_alpha,
                                 out_dtype=jnp.bfloat16)
    out_bf = jax.block_until_ready(out_bf)
    assert out_bf.shape == out.shape
    assert jnp.allclose(out_bf.astype(jnp.float32), y, rtol=3e-2, atol=3e-2)

    print("KERNEL_OK")
</pallas_src>

<mosaic_0001>
module attributes {stable_mosaic.version = 11 : i64} {
  func.func @kernel(%arg0: i32, %arg1: i32, %arg2: memref<1x1x2x8x129xbf16, #tpu.memory_space<vmem>>, %arg3: memref<9x8x8xbf16, #tpu.memory_space<vmem>>, %arg4: memref<3x8x1xf32, #tpu.memory_space<vmem>>, %arg5: memref<1x1x8x112xf32, #tpu.memory_space<vmem>>) attributes {dimension_semantics = [#tpu.dimension_semantics<parallel>, #tpu.dimension_semantics<parallel>], iteration_bounds = array<i64: 2, 1>, scalar_prefetch = 0 : i64, scratch_operands = 0 : i64, tpu.core_type = #tpu.core_type<tc>, window_params = [{transform_indices = @transform_0, window_bounds = array<i64: 1, 1, 2, 8, 129>}, {pipeline_mode = #tpu.pipeline_mode<synchronous>, transform_indices = @transform_1, window_bounds = array<i64: 9, 8, 8>}, {pipeline_mode = #tpu.pipeline_mode<synchronous>, transform_indices = @transform_2, window_bounds = array<i64: 3, 8, 1>}, {transform_indices = @transform_3, window_bounds = array<i64: 1, 1, 8, 112>}]} {
    %c0 = arith.constant 0 : index
    %c0_0 = arith.constant 0 : index
    %c0_1 = arith.constant 0 : index
    %c0_2 = arith.constant 0 : index
    %c0_3 = arith.constant 0 : index
    %0 = vector.load %arg2[%c0, %c0_0, %c0_1, %c0_2, %c0_3] : memref<1x1x2x8x129xbf16, #tpu.memory_space<vmem>>, vector<1x1x1x8x112xbf16>
    %1 = vector.shape_cast %0 : vector<1x1x1x8x112xbf16> to vector<8x112xbf16>
    %c0_4 = arith.constant 0 : index
    %c0_5 = arith.constant 0 : index
    %c0_6 = arith.constant 0 : index
    %2 = vector.load %arg3[%c0_4, %c0_5, %c0_6] : memref<9x8x8xbf16, #tpu.memory_space<vmem>>, vector<1x8x8xbf16>
    %3 = vector.shape_cast %2 : vector<1x8x8xbf16> to vector<8x8xbf16>
    %cst = arith.constant dense<0.000000e+00> : vector<8x112xf32>
    %4 = tpu.matmul %3, %1, %cst {dimension_numbers = #tpu.dot_dimension_numbers<[1], [0], [0], [1], [0, 0, 1, 1], [], []>} : vector<8x8xbf16>, vector<8x112xbf16>, vector<8x112xf32> -> vector<8x112xf32>
    %c0_7 = arith.constant 0 : index
    %c0_8 = arith.constant 0 : index
    %c1 = arith.constant 1 : index
    %c0_9 = arith.constant 0 : index
    %c0_10 = arith.constant 0 : index
    %5 = vector.load %arg2[%c0_7, %c0_8, %c1, %c0_9, %c0_10] : memref<1x1x2x8x129xbf16, #tpu.memory_space<vmem>>, vector<1x1x1x8x112xbf16>
    %6 = vector.shape_cast %5 : vector<1x1x1x8x112xbf16> to vector<8x112xbf16>
    %c1_11 = arith.constant 1 : index
    %c0_12 = arith.constant 0 : index
    %c0_13 = arith.constant 0 : index
    %7 = vector.load %arg3[%c1_11, %c0_12, %c0_13] : memref<9x8x8xbf16, #tpu.memory_space<vmem>>, vector<1x8x8xbf16>
    %8 = vector.shape_cast %7 : vector<1x8x8xbf16> to vector<8x8xbf16>
    %cst_14 = arith.constant dense<0.000000e+00> : vector<8x112xf32>
    %9 = tpu.matmul %8, %6, %cst_14 {dimension_numbers = #tpu.dot_dimension_numbers<[1], [0], [0], [1], [0, 0, 1, 1], [], []>} : vector<8x8xbf16>, vector<8x112xbf16>, vector<8x112xf32> -> vector<8x112xf32>
    %10 = arith.addf %4, %9 : vector<8x112xf32>
    %c0_15 = arith.constant 0 : index
    %c0_16 = arith.constant 0 : index
    %c0_17 = arith.constant 0 : index
    %c0_18 = arith.constant 0 : index
    %c1_19 = arith.constant 1 : index
    %11 = vector.load %arg2[%c0_15, %c0_16, %c0_17, %c0_18, %c1_19] : memref<1x1x2x8x129xbf16, #tpu.memory_space<vmem>>, vector<1x1x1x8x112xbf16>
    %12 = vector.shape_cast %11 : vector<1x1x1x8x112xbf16> to vector<8x112xbf16>
    %c2 = arith.constant 2 : index
    %c0_20 = arith.constant 0 : index
    %c0_21 = arith.constant 0 : index
    %13 = vector.load %arg3[%c2, %c0_20, %c0_21] : memref<9x8x8xbf16, #tpu.memory_space<vmem>>, vector<1x8x8xbf16>
    %14 = vector.shape_cast %13 : vector<1x8x8xbf16> to vector<8x8xbf16>
    %cst_22 = arith.constant dense<0.000000e+00> : vector<8x112xf32>
    %15 = tpu.matmul %14, %12, %cst_22 {dimension_numbers = #tpu.dot_dimension_numbers<[1], [0], [0], [1], [0, 0, 1, 1], [], []>} : vector<8x8xbf16>, vector<8x112xbf16>, vector<8x112xf32> -> vector<8x112xf32>
    %16 = arith.addf %10, %15 : vector<8x112xf32>
    %c0_23 = arith.constant 0 : index
    %c0_24 = arith.constant 0 : index
    %c0_25 = arith.constant 0 : index
    %c0_26 = arith.constant 0 : index
    %c8 = arith.constant 8 : index
    %17 = vector.load %arg2[%c0_23, %c0_24, %c0_25, %c0_26, %c8] : memref<1x1x2x8x129xbf16, #tpu.memory_space<vmem>>, vector<1x1x1x8x112xbf16>
    %18 = vector.shape_cast %17 : vector<1x1x1x8x112xbf16> to vector<8x112xbf16>
    %c3 = arith.constant 3 : index
    %c0_27 = arith.constant 0 : index
    %c0_28 = arith.constant 0 : index
    %19 = vector.load %arg3[%c3, %c0_27, %c0_28] : memref<9x8x8xbf16, #tpu.memory_space<vmem>>, vector<1x8x8xbf16>
    %20 = vector.shape_cast %19 : vector<1x8x8xbf16> to vector<8x8xbf16>
    %cst_29 = arith.constant dense<0.000000e+00> : vector<8x112xf32>
    %21 = tpu.matmul %20, %18, %cst_29 {dimension_numbers = #tpu.dot_dimension_numbers<[1], [0], [0], [1], [0, 0, 1, 1], [], []>} : vector<8x8xbf16>, vector<8x112xbf16>, vector<8x112xf32> -> vector<8x112xf32>
    %22 = arith.addf %16, %21 : vector<8x112xf32>
    %c0_30 = arith.constant 0 : index
    %c0_31 = arith.constant 0 : index
    %c1_32 = arith.constant 1 : index
    %c0_33 = arith.constant 0 : index
    %c8_34 = arith.constant 8 : index
    %23 = vector.load %arg2[%c0_30, %c0_31, %c1_32, %c0_33, %c8_34] : memref<1x1x2x8x129xbf16, #tpu.memory_space<vmem>>, vector<1x1x1x8x112xbf16>
    %24 = vector.shape_cast %23 : vector<1x1x1x8x112xbf16> to vector<8x112xbf16>
    %c4 = arith.constant 4 : index
    %c0_35 = arith.constant 0 : index
    %c0_36 = arith.constant 0 : index
    %25 = vector.load %arg3[%c4, %c0_35, %c0_36] : memref<9x8x8xbf16, #tpu.memory_space<vmem>>, vector<1x8x8xbf16>
    %26 = vector.shape_cast %25 : vector<1x8x8xbf16> to vector<8x8xbf16>
    %cst_37 = arith.constant dense<0.000000e+00> : vector<8x112xf32>
    %27 = tpu.matmul %26, %24, %cst_37 {dimension_numbers = #tpu.dot_dimension_numbers<[1], [0], [0], [1], [0, 0, 1, 1], [], []>} : vector<8x8xbf16>, vector<8x112xbf16>, vector<8x112xf32> -> vector<8x112xf32>
    %28 = arith.addf %22, %27 : vector<8x112xf32>
    %c0_38 = arith.constant 0 : index
    %c0_39 = arith.constant 0 : index
    %c0_40 = arith.constant 0 : index
    %c0_41 = arith.constant 0 : index
    %c9 = arith.constant 9 : index
    %29 = vector.load %arg2[%c0_38, %c0_39, %c0_40, %c0_41, %c9] : memref<1x1x2x8x129xbf16, #tpu.memory_space<vmem>>, vector<1x1x1x8x112xbf16>
    %30 = vector.shape_cast %29 : vector<1x1x1x8x112xbf16> to vector<8x112xbf16>
    %c5 = arith.constant 5 : index
    %c0_42 = arith.constant 0 : index
    %c0_43 = arith.constant 0 : index
    %31 = vector.load %arg3[%c5, %c0_42, %c0_43] : memref<9x8x8xbf16, #tpu.memory_space<vmem>>, vector<1x8x8xbf16>
    %32 = vector.shape_cast %31 : vector<1x8x8xbf16> to vector<8x8xbf16>
    %cst_44 = arith.constant dense<0.000000e+00> : vector<8x112xf32>
    %33 = tpu.matmul %32, %30, %cst_44 {dimension_numbers = #tpu.dot_dimension_numbers<[1], [0], [0], [1], [0, 0, 1, 1], [], []>} : vector<8x8xbf16>, vector<8x112xbf16>, vector<8x112xf32> -> vector<8x112xf32>
    %34 = arith.addf %28, %33 : vector<8x112xf32>
    %c0_45 = arith.constant 0 : index
    %c0_46 = arith.constant 0 : index
    %c0_47 = arith.constant 0 : index
    %c0_48 = arith.constant 0 : index
    %c16 = arith.constant 16 : index
    %35 = vector.load %arg2[%c0_45, %c0_46, %c0_47, %c0_48, %c16] : memref<1x1x2x8x129xbf16, #tpu.memory_space<vmem>>, vector<1x1x1x8x112xbf16>
    %36 = vector.shape_cast %35 : vector<1x1x1x8x112xbf16> to vector<8x112xbf16>
    %c6 = arith.constant 6 : index
    %c0_49 = arith.constant 0 : index
    %c0_50 = arith.constant 0 : index
    %37 = vector.load %arg3[%c6, %c0_49, %c0_50] : memref<9x8x8xbf16, #tpu.memory_space<vmem>>, vector<1x8x8xbf16>
    %38 = vector.shape_cast %37 : vector<1x8x8xbf16> to vector<8x8xbf16>
    %cst_51 = arith.constant dense<0.000000e+00> : vector<8x112xf32>
    %39 = tpu.matmul %38, %36, %cst_51 {dimension_numbers = #tpu.dot_dimension_numbers<[1], [0], [0], [1], [0, 0, 1, 1], [], []>} : vector<8x8xbf16>, vector<8x112xbf16>, vector<8x112xf32> -> vector<8x112xf32>
    %40 = arith.addf %34, %39 : vector<8x112xf32>
    %c0_52 = arith.constant 0 : index
    %c0_53 = arith.constant 0 : index
    %c1_54 = arith.constant 1 : index
    %c0_55 = arith.constant 0 : index
    %c16_56 = arith.constant 16 : index
    %41 = vector.load %arg2[%c0_52, %c0_53, %c1_54, %c0_55, %c16_56] : memref<1x1x2x8x129xbf16, #tpu.memory_space<vmem>>, vector<1x1x1x8x112xbf16>
    %42 = vector.shape_cast %41 : vector<1x1x1x8x112xbf16> to vector<8x112xbf16>
    %c7 = arith.constant 7 : index
    %c0_57 = arith.constant 0 : index
    %c0_58 = arith.constant 0 : index
    %43 = vector.load %arg3[%c7, %c0_57, %c0_58] : memref<9x8x8xbf16, #tpu.memory_space<vmem>>, vector<1x8x8xbf16>
    %44 = vector.shape_cast %43 : vector<1x8x8xbf16> to vector<8x8xbf16>
    %cst_59 = arith.constant dense<0.000000e+00> : vector<8x112xf32>
    %45 = tpu.matmul %44, %42, %cst_59 {dimension_numbers = #tpu.dot_dimension_numbers<[1], [0], [0], [1], [0, 0, 1, 1], [], []>} : vector<8x8xbf16>, vector<8x112xbf16>, vector<8x112xf32> -> vector<8x112xf32>
    %46 = arith.addf %40, %45 : vector<8x112xf32>
    %c0_60 = arith.constant 0 : index
    %c0_61 = arith.constant 0 : index
    %c0_62 = arith.constant 0 : index
    %c0_63 = arith.constant 0 : index
    %c17 = arith.constant 17 : index
    %47 = vector.load %arg2[%c0_60, %c0_61, %c0_62, %c0_63, %c17] : memref<1x1x2x8x129xbf16, #tpu.memory_space<vmem>>, vector<1x1x1x8x112xbf16>
    %48 = vector.shape_cast %47 : vector<1x1x1x8x112xbf16> to vector<8x112xbf16>
    %c8_64 = arith.constant 8 : index
    %c0_65 = arith.constant 0 : index
    %c0_66 = arith.constant 0 : index
    %49 = vector.load %arg3[%c8_64, %c0_65, %c0_66] : memref<9x8x8xbf16, #tpu.memory_space<vmem>>, vector<1x8x8xbf16>
    %50 = vector.shape_cast %49 : vector<1x8x8xbf16> to vector<8x8xbf16>
    %cst_67 = arith.constant dense<0.000000e+00> : vector<8x112xf32>
    %51 = tpu.matmul %50, %48, %cst_67 {dimension_numbers = #tpu.dot_dimension_numbers<[1], [0], [0], [1], [0, 0, 1, 1], [], []>} : vector<8x8xbf16>, vector<8x112xbf16>, vector<8x112xf32> -> vector<8x112xf32>
    %52 = arith.addf %46, %51 : vector<8x112xf32>
    %c0_68 = arith.constant 0 : index
    %c0_69 = arith.constant 0 : index
    %c0_70 = arith.constant 0 : index
    %53 = vector.load %arg4[%c0_68, %c0_69, %c0_70] : memref<3x8x1xf32, #tpu.memory_space<vmem>>, vector<1x8x1xf32>
    %54 = vector.shape_cast %53 : vector<1x8x1xf32> to vector<8x1xf32>
    %c1_71 = arith.constant 1 : index
    %c0_72 = arith.constant 0 : index
    %c0_73 = arith.constant 0 : index
    %55 = vector.load %arg4[%c1_71, %c0_72, %c0_73] : memref<3x8x1xf32, #tpu.memory_space<vmem>>, vector<1x8x1xf32>
    %56 = vector.shape_cast %55 : vector<1x8x1xf32> to vector<8x1xf32>
    %c2_74 = arith.constant 2 : index
    %c0_75 = arith.constant 0 : index
    %c0_76 = arith.constant 0 : index
    %57 = vector.load %arg4[%c2_74, %c0_75, %c0_76] : memref<3x8x1xf32, #tpu.memory_space<vmem>>, vector<1x8x1xf32>
    %58 = vector.shape_cast %57 : vector<1x8x1xf32> to vector<8x1xf32>
    %59 = vector.broadcast %54 : vector<8x1xf32> to vector<8x112xf32>
    %60 = arith.mulf %52, %59 : vector<8x112xf32>
    %61 = vector.broadcast %56 : vector<8x1xf32> to vector<8x112xf32>
    %62 = arith.addf %60, %61 : vector<8x112xf32>
    %cst_77 = arith.constant 0.000000e+00 : f32
    %63 = vector.broadcast %cst_77 : f32 to vector<8x112xf32>
    %64 = arith.cmpf ogt, %62, %63 : vector<8x112xf32>
    %65 = vector.broadcast %58 : vector<8x1xf32> to vector<8x112xf32>
    %66 = arith.mulf %65, %62 : vector<8x112xf32>
    %67 = arith.select %64, %62, %66 : vector<8x112xi1>, vector<8x112xf32>
    %c0_78 = arith.constant 0 : index
    %c0_79 = arith.constant 0 : index
    %c0_80 = arith.constant 0 : index
    %c0_81 = arith.constant 0 : index
    %68 = vector.load %arg5[%c0_78, %c0_79, %c0_80, %c0_81] : memref<1x1x8x112xf32, #tpu.memory_space<vmem>>, vector<1x1x8x112xf32>
    %69 = vector.shape_cast %68 : vector<1x1x8x112xf32> to vector<8x112xf32>
    %70 = vector.shape_cast %67 : vector<8x112xf32> to vector<1x1x8x112xf32>
    tpu.vector_store %arg5[%c0_78, %c0_79, %c0_80, %c0_81], %70 {strides = array<i32>} : memref<1x1x8x112xf32, #tpu.memory_space<vmem>>, vector<1x1x8x112xf32>,
    return
  }
  func.func @transform_0(%arg0: i32, %arg1: i32) -> (i32, i32, i32, i32, i32) {
    %c0_i32 = arith.constant 0 : i32
    %c0_i32_0 = arith.constant 0 : i32
    %c0_i32_1 = arith.constant 0 : i32
    %c0_i32_2 = arith.constant 0 : i32
    return %arg0, %arg1, %c0_i32, %c0_i32_0, %c0_i32_1 : i32, i32, i32, i32, i32
  }
  func.func @transform_1(%arg0: i32, %arg1: i32) -> (i32, i32, i32) {
    %c0_i32 = arith.constant 0 : i32
    %c0_i32_0 = arith.constant 0 : i32
    %c0_i32_1 = arith.constant 0 : i32
    %c0_i32_2 = arith.constant 0 : i32
    return %c0_i32, %c0_i32_0, %c0_i32_1 : i32, i32, i32
  }
  func.func @transform_2(%arg0: i32, %arg1: i32) -> (i32, i32, i32) {
    %c0_i32 = arith.constant 0 : i32
    %c0_i32_0 = arith.constant 0 : i32
    %c0_i32_1 = arith.constant 0 : i32
    %c0_i32_2 = arith.constant 0 : i32
    return %c0_i32, %c0_i32_0, %c0_i32_1 : i32, i32, i32
  }
  func.func @transform_3(%arg0: i32, %arg1: i32) -> (i32, i32, i32, i32) {
    %c0_i32 = arith.constant 0 : i32
    %c0_i32_0 = arith.constant 0 : i32
    %c0_i32_1 = arith.constant 0 : i32
    return %arg0, %arg1, %c0_i32, %c0_i32_0 : i32, i32, i32, i32
  }
}

</mosaic_0001>

<llo_original>
// kernel: tpu_custom_call.1
$region0: #{tpu_custom_call.1}
  #allocation0 [shape = 'u32[]', space=smem, size = 0x4, offset = 0x4, fixed_abs, tag = 'smem constant byte address 0x4 - core index']
  #allocation1 [shape = 'u32[72,128]{1,0:T(1,128)}', space=vmem, size = 0x9000, scoped, tag = 'internal scratch']
  %s0 = inlined_call_operand.vmem [shape: bf16[2,1,2,8,129], index: 0, kind: input, shape index: {}]
  %s1 = inlined_call_operand.vmem [shape: bf16[9,8,8], index: 1, kind: input, shape index: {}]
  %s2 = inlined_call_operand.vmem [shape: f32[3,8,1], index: 2, kind: input, shape index: {}]
  %s3 = inlined_call_operand.hbm [shape: f32[2,1,8,112], index: 3, kind: output, shape index: {}]
  %s4 = sld [smem:[#allocation0]]
  $region45: #{tpu_custom_call.1} parent=0
    _
  %s6 = ssub.s32 1, %s4
  %s7 = scalar_select 0, %s6, %s4
  $region1: #{tpu_custom_call.1} parent=0
    #allocation2 [shape = 'u8[8192]{0}', space=vmem, size = 0x2000, scoped, tag = 'output window, operand 0']
    #allocation3 [shape = 's32[2]{0}', space=sflag, size = 0x8, scoped, tag = 'scoped memory for tpu_custom_call.1']
    %8 = vsyncpa [#allocation3], 0
    %s9 = scalar_lea.sflag [#allocation3], 1
    %10 = vsyncpa %s9, 0
    loop: start=0, step=1, limit=4
    $region2: #{tpu_custom_call.1} parent=1 // loop_pre_header
      _
    $region3: #{tpu_custom_call.1} parent=1 // loop_header
      %s12 = sphi 0, %s16
      %p13 = scmp.ge.s32.totalorder %s12, 4
      %s19 = sphi 0, %s31
      %s20 = sphi 0, %s27
      %s21 = sphi 0, %s19
      %s22 = sphi 0, %s20
      %s23 = sphi 0, %s21
      %s24 = sphi 0, %s22
      %s36 = sphi 0, %s38
      %s39 = sphi 0, %s36
      %s40 = sphi 0, %s39
      %s56 = sphi 0, %s40
      %s60 = sphi 0, %s60
      %s62 = sphi 0, %s60
      %s63 = sphi 0, %s62
      %s77 = sphi 0, %s63
      %s81 = sphi 0, %s81
      %s83 = sphi 0, %s81
      %s84 = sphi 0, %s83
      %s98 = sphi 0, %s84
      %s106 = sphi 0, %s108
      %s109 = sphi 0, %s106
      %s110 = sphi 0, %s109
      %s126 = sphi 0, %s110
    $region4: #{tpu_custom_call.1} parent=1 // loop_header_branch
      %15 = sbr.rel (%p13) target = $region8
    $region5: #{tpu_custom_call.1} parent=1 // loop_body
      %s17 = ssub.s32 %s12, 1
      %s18 = ssub.s32 %s12, 2
      %s25 = sadd.s32 1, %s20
      %p26 = scmp.ge.s32.totalorder %s25, 1
      %s27 = scalar_select %p26, 0, %s25
      %s28 = sadd.s32 1, %s19
      %s29 = scalar_select %p26, %s28, %s19
      %p30 = scmp.ge.s32.totalorder %s29, 2
      %s31 = scalar_select %p30, 0, %s29
      %s32 = ssub.s32 %s19, %s31
      %s33 = ssub.s32 %s20, %s27
      %s34 = sor.u32 %s32, %s33
      %p35 = scmp.eq.s32.totalorder %s34, 0
      %s37 = sadd.s32 %s36, 1
      %s38 = scalar_select %p35, %s36, %s37
      %p41 = pneg %p35
      %p42 = scmp.eq.s32.totalorder %s12, 1
      %p43 = por %p41, %p42
      %p44 = scmp.ne.s32.totalorder %s36, %s39
      %p45 = scmp.eq.s32.totalorder %s12, 0
      %p46 = por %p44, %p45
      %p47 = scmp.ne.s32.totalorder %s36, %s39
      %p48 = scmp.eq.s32.totalorder %s17, 1
      %p49 = por %p47, %p48
      %p50 = scmp.ne.s32.totalorder %s39, %s40
      %p51 = scmp.eq.s32.totalorder %s17, 0
      %p52 = por %p50, %p51
      %p53 = scmp.ne.s32.totalorder %s39, %s40
      %p54 = scmp.eq.s32.totalorder %s18, 1
      %p55 = por %p53, %p54
      %p57 = scmp.ne.s32.totalorder %s40, %s56
      %p58 = scmp.eq.s32.totalorder %s18, 0
      %p59 = por %p57, %p58
      %s61 = sadd.s32 %s60, 1
      %p64 = scmp.eq.s32.totalorder %s12, 1
      %p65 = scmp.ne.s32.totalorder %s60, %s62
      %p66 = scmp.eq.s32.totalorder %s12, 0
      %p67 = por %p65, %p66
      %p68 = scmp.ne.s32.totalorder %s60, %s62
      %p69 = scmp.eq.s32.totalorder %s17, 1
      %p70 = por %p68, %p69
      %p71 = scmp.ne.s32.totalorder %s62, %s63
      %p72 = scmp.eq.s32.totalorder %s17, 0
      %p73 = por %p71, %p72
      %p74 = scmp.ne.s32.totalorder %s62, %s63
      %p75 = scmp.eq.s32.totalorder %s18, 1
      %p76 = por %p74, %p75
      %p78 = scmp.ne.s32.totalorder %s63, %s77
      %p79 = scmp.eq.s32.totalorder %s18, 0
      %p80 = por %p78, %p79
      %s82 = sadd.s32 %s81, 1
      %p85 = scmp.eq.s32.totalorder %s12, 1
      %p86 = scmp.ne.s32.totalorder %s81, %s83
      %p87 = scmp.eq.s32.totalorder %s12, 0
      %p88 = por %p86, %p87
      %p89 = scmp.ne.s32.totalorder %s81, %s83
      %p90 = scmp.eq.s32.totalorder %s17, 1
      %p91 = por %p89, %p90
      %p92 = scmp.ne.s32.totalorder %s83, %s84
      %p93 = scmp.eq.s32.totalorder %s17, 0
      %p94 = por %p92, %p93
      %p95 = scmp.ne.s32.totalorder %s83, %s84
      %p96 = scmp.eq.s32.totalorder %s18, 1
      %p97 = por %p95, %p96
      %p99 = scmp.ne.s32.totalorder %s84, %s98
      %p100 = scmp.eq.s32.totalorder %s18, 0
      %p101 = por %p99, %p100
      %s102 = ssub.s32 %s19, %s31
      %s103 = ssub.s32 %s20, %s27
      %s104 = sor.u32 %s102, %s103
      %p105 = scmp.eq.s32.totalorder %s104, 0
      %s107 = sadd.s32 %s106, 1
      %s108 = scalar_select %p105, %s106, %s107
      %p111 = pneg %p105
      %p112 = scmp.eq.s32.totalorder %s12, 1
      %p113 = por %p111, %p112
      %p114 = scmp.ne.s32.totalorder %s106, %s109
      %p115 = scmp.eq.s32.totalorder %s12, 0
      %p116 = por %p114, %p115
      %p117 = scmp.ne.s32.totalorder %s106, %s109
      %p118 = scmp.eq.s32.totalorder %s17, 1
      %p119 = por %p117, %p118
      %p120 = scmp.ne.s32.totalorder %s109, %s110
      %p121 = scmp.eq.s32.totalorder %s17, 0
      %p122 = por %p120, %p121
      %p123 = scmp.ne.s32.totalorder %s109, %s110
      %p124 = scmp.eq.s32.totalorder %s18, 1
      %p125 = por %p123, %p124
      %p127 = scmp.ne.s32.totalorder %s110, %s126
      %p128 = scmp.eq.s32.totalorder %s18, 0
      %p129 = por %p127, %p128
      %p130 = scmp.le.s32.totalorder 1, %s12
      %p131 = scmp.lt.s32.totalorder %s12, 3
      %p132 = pnand %p130, %p131
      %p133 = pneg %p132
      // Predicated region
      $region9: #{tpu_custom_call.1} parent=5 // pred_check
        _
      $region10: #{tpu_custom_call.1} parent=5 // pred_check_branch
        %135 = sbr.rel (%p132) target = $region12
      $region11: #{tpu_custom_call.1} parent=5 // pred_region
        %s136 = ssub.s32 %s12, 1
        // Predicated region
        $region13: #{tpu_custom_call.1} parent=11 // pred_check
          %p137 = pneg %p73
        $region14: #{tpu_custom_call.1} parent=11 // pred_check_branch
          %139 = sbr.rel (%p137) target = $region16
        $region15: #{tpu_custom_call.1} parent=11 // pred_region
          _
        $region16: #{tpu_custom_call.1} parent=11 // pred_fallthru
          _
        // Predicated region
        $region17: #{tpu_custom_call.1} parent=11 // pred_check
          %p140 = pneg %p94
        $region18: #{tpu_custom_call.1} parent=11 // pred_check_branch
          %142 = sbr.rel (%p140) target = $region20
        $region19: #{tpu_custom_call.1} parent=11 // pred_region
          _
        $region20: #{tpu_custom_call.1} parent=11 // pred_fallthru
          _
      $region12: #{tpu_custom_call.1} parent=5 // pred_fallthru
        _
      %p143 = scmp.lt.s32.totalorder %s12, 2
      // Predicated region
      $region21: #{tpu_custom_call.1} parent=5 // pred_check
        %p144 = pneg %p143
      $region22: #{tpu_custom_call.1} parent=5 // pred_check_branch
        %146 = sbr.rel (%p144) target = $region24
      $region23: #{tpu_custom_call.1} parent=5 // pred_region
        // Predicated region
        $region25: #{tpu_custom_call.1} parent=23 // pred_check
          %p147 = pneg %p46
        $region26: #{tpu_custom_call.1} parent=23 // pred_check_branch
          %149 = sbr.rel (%p147) target = $region28
        $region27: #{tpu_custom_call.1} parent=23 // pred_region
          %p150 = scmp.lt.s32.totalorder %s19, 1
          %s151 = scalar_select %p150, %s19, 1
          %p152 = scmp.lt.s32.totalorder %s20, 0
          %s153 = scalar_select %p152, %s20, 0
          %s154 = smul.addr %s153, 4
          %s155 = smul.addr %s151, 4
          %s156 = sadd.s32 %s154, %s155
          %s157 = smul.addr %s156, 4
          %s158 = scalar_lea.vmem %s0, %s157
        $region28: #{tpu_custom_call.1} parent=23 // pred_fallthru
          _
      $region24: #{tpu_custom_call.1} parent=5 // pred_fallthru
        _
      %p159 = scmp.le.s32.totalorder 1, %s12
      %p160 = scmp.lt.s32.totalorder %s12, 3
      %p161 = pnand %p159, %p160
      %p162 = pneg %p161
      // Predicated region
      $region29: #{tpu_custom_call.1} parent=5 // pred_check
        _
      $region30: #{tpu_custom_call.1} parent=5 // pred_check_branch
        %164 = sbr.rel (%p161) target = $region32
      $region31: #{tpu_custom_call.1} parent=5 // pred_region
        %s165 = ssub.s32 %s12, 1
        %p166 = scmp.lt.s32.totalorder %s21, 1
        %s167 = scalar_select %p166, %s21, 1
        %p168 = scmp.lt.s32.totalorder %s22, 0
        %s169 = scalar_select %p168, %s22, 0
        %s170 = smul.addr %s169, 4
        %s171 = smul.addr %s167, 4
        %s172 = sadd.s32 %s170, %s171
        %s173 = smul.addr %s172, 4
        %s174 = scalar_lea.vmem %s0, %s173
        %p175 = pneg %p52
        %p176 = pneg %p49
        %p177 = pneg %p73
        %p178 = pneg %p70
        %p179 = pneg %p94
        %p180 = pneg %p91
        %p181 = pneg %p122
        %p182 = pneg %p119
        %s183 = sand.u32 %s109, 1
        %s184 = scalar_lea.sflag [#allocation3], %s183
        %s185 = sand.u32 %s109, 1
        %s186 = smul.addr %s185, 8
        %s187 = scalar_lea.vmem [#allocation2], %s186
        %p188 = scmp.lt.s32.totalorder %s21, 1
        %s189 = scalar_select %p188, %s21, 1
        %p190 = scmp.lt.s32.totalorder %s22, 0
        %s191 = scalar_select %p190, %s22, 0
        %s192 = smul.addr %s191, 4
        %s193 = smul.addr %s189, 4
        %s194 = sadd.s32 %s192, %s193
        %s195 = smul.addr %s194, 4
        %s196 = scalar_lea.vmem %s0, %s195
        %v198 = vld [vmem:[%s196] sm:$0xf]
        %v199 = vld [vmem:[%s1] sm:$0xf]
        %s200 = scalar_lea.vmem %s196, 8
        %v201 = vld [vmem:[%s200] sm:$0xf]
        %s202 = scalar_lea.vmem %s1, 4
        %v203 = vld [vmem:[%s202] sm:$0xf]
        %vm204 = vcmask 64512
        %v206 = vsel %vm204, %v203, 0
        %vm208 = vcmask 1043456
        %v210 = vsel %vm208, %v201, 0
        %212 = vmatpush.bf16.msra.mxu0 0
        %213 = vmatpush.bf16.msra.mxu0 0
        %214 = vmatpush.bf16.msra.mxu0 0
        %215 = vmatpush.bf16.msra.mxu0 0
        %216 = vmatpush.bf16.msra.mxu0 0
        %217 = vmatpush.bf16.msra.mxu0 0
        %218 = vmatpush.bf16.msra.mxu0 0
        %219 = vmatpush.bf16.msra.mxu0 %v210
        %220 = vmatmul.bf16.gmra.mxu0 %v206
        %v221 = vpop.f32.mrf.mxu0
        %v222 = vadd.f32 0.0, %v221
        %v223 = vpop.f32.mrf.mxu0
        %224 = vdwg.mxu0
        %v226 = vsel %vm204, %v199, 0
        %v229 = vsel %vm208, %v198, 0
        %231 = vmatpush.bf16.msra.mxu0 0
        %232 = vmatpush.bf16.msra.mxu0 0
        %233 = vmatpush.bf16.msra.mxu0 0
        %234 = vmatpush.bf16.msra.mxu0 0
        %235 = vmatpush.bf16.msra.mxu0 0
        %236 = vmatpush.bf16.msra.mxu0 0
        %237 = vmatpush.bf16.msra.mxu0 0
        %238 = vmatpush.bf16.msra.mxu0 %v229
        %239 = vmatmul.bf16.gmra.mxu0 %v226
        %v240 = vpop.f32.mrf.mxu0
        %v241 = vadd.f32 %v222, %v240
        %v242 = vpop.f32.mrf.mxu0
        %243 = vdwg.mxu0
        %s244 = scalar_lea.vmem %s1, 8
        %v245 = vld [vmem:[%s244] sm:$0xf]
        %v247 = vunpack.c.l.b16 %v198
        %v248 = vpack.c.b16 %v247, %v247
        %249 = vrot.lane.b32.xlu0 %v248, 127
        %v250 = vpop.permute.xlu0 %249
        %v252 = vsel %vm204, %v245, 0
        %v255 = vsel %vm208, %v250, 0
        %257 = vmatpush.bf16.msra.mxu0 0
        %258 = vmatpush.bf16.msra.mxu0 0
        %259 = vmatpush.bf16.msra.mxu0 0
        %260 = vmatpush.bf16.msra.mxu0 0
        %261 = vmatpush.bf16.msra.mxu0 0
        %262 = vmatpush.bf16.msra.mxu0 0
        %263 = vmatpush.bf16.msra.mxu0 0
        %264 = vmatpush.bf16.msra.mxu0 %v255
        %265 = vmatmul.bf16.gmra.mxu0 %v252
        %v266 = vpop.f32.mrf.mxu0
        %v267 = vadd.f32 0.0, %v266
        %v268 = vpop.f32.mrf.mxu0
        %269 = vdwg.mxu0
        %v270 = vadd.f32 %v241, %v267
        %s271 = scalar_lea.vmem %s1, 12
        %v272 = vld [vmem:[%s271] sm:$0xf]
        %273 = vrot.lane.b32.xlu0 %v248, 120
        %v274 = vpop.permute.xlu0 %273
        %v276 = vsel %vm204, %v272, 0
        %v279 = vsel %vm208, %v274, 0
        %281 = vmatpush.bf16.msra.mxu0 0
        %282 = vmatpush.bf16.msra.mxu0 0
        %283 = vmatpush.bf16.msra.mxu0 0
        %284 = vmatpush.bf16.msra.mxu0 0
        %285 = vmatpush.bf16.msra.mxu0 0
        %286 = vmatpush.bf16.msra.mxu0 0
        %287 = vmatpush.bf16.msra.mxu0 0
        %288 = vmatpush.bf16.msra.mxu0 %v279
        %289 = vmatmul.bf16.gmra.mxu0 %v276
        %v290 = vpop.f32.mrf.mxu0
        %v291 = vadd.f32 0.0, %v290
        %v292 = vpop.f32.mrf.mxu0
        %293 = vdwg.mxu0
        %v294 = vadd.f32 %v270, %v291
        %s295 = scalar_lea.vmem %s1, 16
        %v296 = vld [vmem:[%s295] sm:$0xf]
        %v298 = vunpack.c.l.b16 %v201
        %v299 = vpack.c.b16 %v298, %v298
        %300 = vrot.lane.b32.xlu0 %v299, 120
        %v301 = vpop.permute.xlu0 %300
        %v303 = vsel %vm204, %v296, 0
        %v306 = vsel %vm208, %v301, 0
        %308 = vmatpush.bf16.msra.mxu0 0
        %309 = vmatpush.bf16.msra.mxu0 0
        %310 = vmatpush.bf16.msra.mxu0 0
        %311 = vmatpush.bf16.msra.mxu0 0
        %312 = vmatpush.bf16.msra.mxu0 0
        %313 = vmatpush.bf16.msra.mxu0 0
        %314 = vmatpush.bf16.msra.mxu0 0
        %315 = vmatpush.bf16.msra.mxu0 %v306
        %316 = vmatmul.bf16.gmra.mxu0 %v303
        %v317 = vpop.f32.mrf.mxu0
        %v318 = vadd.f32 0.0, %v317
        %v319 = vpop.f32.mrf.mxu0
        %320 = vdwg.mxu0
        %v321 = vadd.f32 %v294, %v318
        %s322 = scalar_lea.vmem %s1, 20
        %v323 = vld [vmem:[%s322] sm:$0xf]
        %324 = vrot.lane.b32.xlu0 %v248, 119
        %v325 = vpop.permute.xlu0 %324
        %v327 = vsel %vm204, %v323, 0
        %v330 = vsel %vm208, %v325, 0
        %332 = vmatpush.bf16.msra.mxu0 0
        %333 = vmatpush.bf16.msra.mxu0 0
        %334 = vmatpush.bf16.msra.mxu0 0
        %335 = vmatpush.bf16.msra.mxu0 0
        %336 = vmatpush.bf16.msra.mxu0 0
        %337 = vmatpush.bf16.msra.mxu0 0
        %338 = vmatpush.bf16.msra.mxu0 0
        %339 = vmatpush.bf16.msra.mxu0 %v330
        %340 = vmatmul.bf16.gmra.mxu0 %v327
        %v341 = vpop.f32.mrf.mxu0
        %v342 = vadd.f32 0.0, %v341
        %v343 = vpop.f32.mrf.mxu0
        %344 = vdwg.mxu0
        %v345 = vadd.f32 %v321, %v342
        %s346 = scalar_lea.vmem %s1, 24
        %v347 = vld [vmem:[%s346] sm:$0xf]
        %348 = vrot.lane.b32.xlu0 %v248, 112
        %v349 = vpop.permute.xlu0 %348
        %v351 = vsel %vm204, %v347, 0
        %v354 = vsel %vm208, %v349, 0
        %356 = vmatpush.bf16.msra.mxu0 0
        %357 = vmatpush.bf16.msra.mxu0 0
        %358 = vmatpush.bf16.msra.mxu0 0
        %359 = vmatpush.bf16.msra.mxu0 0
        %360 = vmatpush.bf16.msra.mxu0 0
        %361 = vmatpush.bf16.msra.mxu0 0
        %362 = vmatpush.bf16.msra.mxu0 0
        %363 = vmatpush.bf16.msra.mxu0 %v354
        %364 = vmatmul.bf16.gmra.mxu0 %v351
        %v365 = vpop.f32.mrf.mxu0
        %v366 = vadd.f32 0.0, %v365
        %v367 = vpop.f32.mrf.mxu0
        %368 = vdwg.mxu0
        %v369 = vadd.f32 %v345, %v366
        %s370 = scalar_lea.vmem %s1, 28
        %v371 = vld [vmem:[%s370] sm:$0xf]
        %372 = vrot.lane.b32.xlu0 %v299, 112
        %v373 = vpop.permute.xlu0 %372
        %v375 = vsel %vm204, %v371, 0
        %v378 = vsel %vm208, %v373, 0
        %380 = vmatpush.bf16.msra.mxu0 0
        %381 = vmatpush.bf16.msra.mxu0 0
        %382 = vmatpush.bf16.msra.mxu0 0
        %383 = vmatpush.bf16.msra.mxu0 0
        %384 = vmatpush.bf16.msra.mxu0 0
        %385 = vmatpush.bf16.msra.mxu0 0
        %386 = vmatpush.bf16.msra.mxu0 0
        %387 = vmatpush.bf16.msra.mxu0 %v378
        %388 = vmatmul.bf16.gmra.mxu0 %v375
        %v389 = vpop.f32.mrf.mxu0
        %v390 = vadd.f32 0.0, %v389
        %v391 = vpop.f32.mrf.mxu0
        %392 = vdwg.mxu0
        %v393 = vadd.f32 %v369, %v390
        %v394 = vld [vmem:[%s196] sm:$0xff]
        %s395 = scalar_lea.vmem %s1, 32
        %v396 = vld [vmem:[%s395] sm:$0xf]
        %v398 = vunpack.c.l.b16 %v394
        %v399 = vunpack.c.h.b16 %v394
        %v400 = vpack.c.b16 %v398, %v398
        %v401 = vpack.c.b16 %v399, %v399
        %402 = vrot.lane.b32.xlu0 %v400, 111
        %v403 = vpop.permute.xlu0 %402
        %404 = vrot.lane.b32.xlu0 %v401, 111
        %v405 = vpop.permute.xlu0 %404
        %vm406 = vcmask 908288
        %v407 = vsel %vm406, %v403, %v405
        %v409 = vsel %vm204, %v396, 0
        %v412 = vsel %vm208, %v407, 0
        %414 = vmatpush.bf16.msra.mxu0 0
        %415 = vmatpush.bf16.msra.mxu0 0
        %416 = vmatpush.bf16.msra.mxu0 0
        %417 = vmatpush.bf16.msra.mxu0 0
        %418 = vmatpush.bf16.msra.mxu0 0
        %419 = vmatpush.bf16.msra.mxu0 0
        %420 = vmatpush.bf16.msra.mxu0 0
        %421 = vmatpush.bf16.msra.mxu0 %v412
        %422 = vmatmul.bf16.gmra.mxu0 %v409
        %v423 = vpop.f32.mrf.mxu0
        %v424 = vadd.f32 0.0, %v423
        %v425 = vpop.f32.mrf.mxu0
        %426 = vdwg.mxu0
        %v427 = vadd.f32 %v393, %v424
        %v428 = vld [vmem:[%s2] sm:$0xff]
        %s429 = scalar_lea.vmem %s2, 8
        %v430 = vld [vmem:[%s429] sm:$0xff]
        %s431 = scalar_lea.vmem %s2, 16
        %v432 = vld [vmem:[%s431] sm:$0xff]
        %434 = vset.pattern.permute.xlu0 0
        %435 = vperm.xlu0 %434, %v428
        %v436 = vpop.permute.xlu0 %435
        %v438 = vmul.f32 %v427, %v436
        %440 = vset.pattern.permute.xlu0 0
        %441 = vperm.xlu0 %440, %v430
        %v442 = vpop.permute.xlu0 %441
        %v444 = vadd.f32 %v438, %v442
        %vm445 = vcmp.gt.f32.partialorder %v444, 0.0
        %447 = vset.pattern.permute.xlu0 0
        %448 = vperm.xlu0 %447, %v432
        %v449 = vpop.permute.xlu0 %448
        %v451 = vmul.f32 %v449, %v444
        %v452 = vsel %vm445, %v444, %v451
        %vm453 = vcmask 916480
        %454 = vst.msk [vmem:[%s187] sm:$0xff] %vm453, %v452
        %s455 = sand.u32 %s109, 1
        %s456 = scalar_lea.sflag [#allocation3], %s455
        %s457 = sand.u32 %s109, 1
        %s458 = smul.addr %s457, 8
        %s459 = scalar_lea.vmem [#allocation2], %s458
        // Predicated region
        $region33: #{tpu_custom_call.1} parent=31 // pred_check
          %p460 = pneg %p119
        $region34: #{tpu_custom_call.1} parent=31 // pred_check_branch
          %462 = sbr.rel (%p460) target = $region36
        $region35: #{tpu_custom_call.1} parent=31 // pred_region
          %464 = vsyncadd %s456, 0
          %s465 = sadd.s32 %s22, %s21
          %s466 = smul.addr %s465, 8
          %s467 = scalar_lea.hbm %s3, %s466
          %s469 = sshll.u32 %s459, 4
          %s470 = int_to_ptr.vmem [resolvable:$true] %s469
          %s471 = sshll.u32 %s467, 4
          %s472 = int_to_ptr.hbm [resolvable:$true] %s471
          %474 = dma.vmem_to_hbm [thread:$0]  %s470, 128, %s472, %s456
        $region36: #{tpu_custom_call.1} parent=31 // pred_fallthru
          _
      $region32: #{tpu_custom_call.1} parent=5 // pred_fallthru
        _
      %p475 = scmp.le.s32.totalorder 2, %s12
      // Predicated region
      $region37: #{tpu_custom_call.1} parent=5 // pred_check
        %p476 = pneg %p475
      $region38: #{tpu_custom_call.1} parent=5 // pred_check_branch
        %478 = sbr.rel (%p476) target = $region40
      $region39: #{tpu_custom_call.1} parent=5 // pred_region
        %s479 = ssub.s32 %s12, 2
        // Predicated region
        $region41: #{tpu_custom_call.1} parent=39 // pred_check
          %p480 = pneg %p125
        $region42: #{tpu_custom_call.1} parent=39 // pred_check_branch
          %482 = sbr.rel (%p480) target = $region44
        $region43: #{tpu_custom_call.1} parent=39 // pred_region
          %s483 = sand.u32 %s110, 1
          %s484 = scalar_lea.sflag [#allocation3], %s483
          %s485 = sand.u32 %s110, 1
          %s486 = smul.addr %s485, 8
          %s487 = scalar_lea.vmem [#allocation2], %s486
          %489 = dma.done %s484, 128
        $region44: #{tpu_custom_call.1} parent=39 // pred_fallthru
          _
      $region40: #{tpu_custom_call.1} parent=5 // pred_fallthru
        _
    $region6: #{tpu_custom_call.1} parent=1 // loop_footer
      %s16 = sadd.s32 1, %s12
    $region7: #{tpu_custom_call.1} parent=1 // loop_footer_branch
      %11 = sbr.rel target = $region3
    $region8: #{tpu_custom_call.1} parent=1 // loop_exit
      _
    %490 = vsyncpa [#allocation3], 1
    %s491 = scalar_lea.sflag [#allocation3], 1
    %492 = vsyncpa %s491, 1

</llo_original>
